<compile_context>
chip_gen: v6e
topology: v6e:2x2x1
jax: 0.10.0
libtpu: 0.0.40
codegen_flags: <defaults>
</compile_context>

<pallas_src>
import jax
import jax.numpy as jnp
from jax.experimental import pallas as pl
from jax.experimental.pallas import tpu as pltpu


_PACK = 8  # logical rows packed per physical (lane-dense) row


def centroid_kernel(x_ref, w1_ref, b1_ref, w2_ref, b2_ref, o_ref):
    # fc1 (packed): (TBp, P*In) @ (P*In, P*H) -> f32 accumulate on the MXU.
    h = jnp.dot(x_ref[...], w1_ref[...], preferred_element_type=jnp.float32)
    # bias add + ReLU in f32 on the VPU.
    h = jnp.maximum(h + b1_ref[...], 0.0)
    # fc2 (packed): cast activations to the weight operand dtype for the MXU.
    out = jnp.dot(h.astype(w2_ref.dtype), w2_ref[...],
                  preferred_element_type=jnp.float32)
    o_ref[...] = (out + b2_ref[...]).astype(o_ref.dtype)


def prepare_params(w1, b1, w2, b2, *, compute_dtype=jnp.bfloat16):
    """One-time glue: pre-transpose + 8-way block-diagonal packing of weights.

    w1: (H, In), b1: (H,), w2: (Out, H), b2: (Out,)  (PyTorch nn.Linear layout).
    `compute_dtype` is the MXU operand dtype for the weights (biases stay f32).
    """
    H, In = w1.shape
    Out = w2.shape[0]
    cd = jnp.dtype(compute_dtype)
    eye = jnp.eye(_PACK, dtype=jnp.float32)
    w1_blk = jnp.kron(eye, jnp.asarray(w1, jnp.float32).T).astype(cd)  # (P*In, P*H)
    w2_blk = jnp.kron(eye, jnp.asarray(w2, jnp.float32).T).astype(cd)  # (P*H, P*Out)
    b1_blk = jnp.tile(jnp.asarray(b1, jnp.float32).reshape(1, H), (1, _PACK))
    b2_blk = jnp.tile(jnp.asarray(b2, jnp.float32).reshape(1, Out), (1, _PACK))
    return {"w1": w1_blk, "b1": b1_blk, "w2": w2_blk, "b2": b2_blk}


def _round_up(x, m):
    return (x + m - 1) // m * m


def centroid_nn_forward(x, params, *, block_batch=65536, out_dtype=None):
    """Fused fc1 -> ReLU -> fc2.

    x: (B, In).  params: output of prepare_params().  Returns (B, Out) in
    `out_dtype` (defaults to x's dtype).  For the full HBM-bandwidth win pass x
    already in the params' compute dtype (e.g. bfloat16); otherwise a one-off
    cast pass runs before the kernel.
    """
    w1_blk, b1_blk = params["w1"], params["b1"]
    w2_blk, b2_blk = params["w2"], params["b2"]

    P = _PACK
    In = w1_blk.shape[0] // P
    H = w1_blk.shape[1] // P
    Out = w2_blk.shape[1] // P

    B = x.shape[0]
    assert x.shape[1] == In, f"expected x with {In} features, got {x.shape}"
    if out_dtype is None:
        out_dtype = x.dtype
    out_dtype = jnp.dtype(out_dtype)

    cd = w1_blk.dtype
    x_c = x.astype(cd) if x.dtype != cd else x

    # Pad only to a multiple of the 8-row packing (copies only when B % 8 != 0).
    Bp = _round_up(B, P)
    if Bp != B:
        x_c = jnp.pad(x_c, ((0, Bp - B), (0, 0)))
    rows = Bp // P
    x_p = x_c.reshape(rows, P * In)            # free: row-major contiguous

    in_itemsize = jnp.dtype(cd).itemsize
    out_itemsize = out_dtype.itemsize

    # ---- batch tile (in packed rows) --------------------------------------
    # Double-buffered streaming payload (x tile + out tile) capped at ~40 MiB
    # so the same tile is safe under v7x's 64 MiB VMEM; weights add < 1 MiB.
    per_row_bytes = P * In * in_itemsize + P * Out * out_itemsize
    payload_budget = 40 * 1024 * 1024
    max_tbp = max(8, (payload_budget // (2 * per_row_bytes)) // 8 * 8)
    want_tbp = _round_up(max(pl.cdiv(min(block_batch, Bp), P), 8), 8)
    tbp = min(want_tbp, max_tbp, _round_up(rows, 8))

    grid = (pl.cdiv(rows, tbp),)   # ragged edge handled by Pallas block masking

    # Raise the scoped-VMEM limit only when the tile needs it (v5e default is
    # 16 MiB); never above 48 MiB (v7x physical VMEM is 64 MiB per TC).
    w_bytes = ((w1_blk.size + w2_blk.size) * in_itemsize
               + (b1_blk.size + b2_blk.size) * 4)
    need = 2 * tbp * per_row_bytes + 2 * w_bytes + (2 << 20)
    vmem_limit = None if need <= (16 << 20) else min(_round_up(need, 1 << 20),
                                                     48 << 20)

    flops = 2 * rows * (P * In * P * H + P * H * P * Out)
    bytes_accessed = (rows * P * In * in_itemsize
                      + rows * P * Out * out_itemsize + w_bytes)

    out_p = pl.pallas_call(
        centroid_kernel,
        out_shape=jax.ShapeDtypeStruct((rows, P * Out), out_dtype),
        grid_spec=pltpu.PrefetchScalarGridSpec(
            num_scalar_prefetch=0,
            grid=grid,
            in_specs=[
                pl.BlockSpec((tbp, P * In), lambda i: (i, 0)),    # streamed x
                pl.BlockSpec((P * In, P * H), lambda i: (0, 0)),  # resident W1
                pl.BlockSpec((1, P * H), lambda i: (0, 0)),       # resident b1
                pl.BlockSpec((P * H, P * Out), lambda i: (0, 0)),  # resident W2
                pl.BlockSpec((1, P * Out), lambda i: (0, 0)),      # resident b2
            ],
            out_specs=pl.BlockSpec((tbp, P * Out), lambda i: (i, 0)),
        ),
        compiler_params=pltpu.CompilerParams(
            dimension_semantics=("parallel",),
            vmem_limit_bytes=vmem_limit,
        ),
        cost_estimate=pl.CostEstimate(
            flops=flops, transcendentals=0, bytes_accessed=bytes_accessed),
    )(x_p, w1_blk, b1_blk, w2_blk, b2_blk)

    out = out_p.reshape(Bp, Out)               # free: row-major contiguous
    if Bp != B:
        out = out[:B]
    return out


def init_linear_params(key, in_features, out_features, dtype=jnp.float32):
    """Deterministic init mimicking nn.Linear's default (uniform +/- 1/sqrt(fan_in))."""
    kw, kb = jax.random.split(key)
    bound = 1.0 / (in_features ** 0.5)
    w = jax.random.uniform(kw, (out_features, in_features), dtype, -bound, bound)
    b = jax.random.uniform(kb, (out_features,), dtype, -bound, bound)
    return w, b


if __name__ == "__main__":
    # Small shapes consistent with the module (x: (batch, input_size)).
    # batch=200 exercises: pad-to-8 path, multi-step grid, and the ragged edge
    # block (26 packed rows, tile of 8 -> 4 grid steps, last one partial).
    batch, input_size, hidden_size, output_size = 200, 32, 64, 16

    key = jax.random.PRNGKey(0)
    kx, k1, k2 = jax.random.split(key, 3)

    x = jax.random.normal(kx, (batch, input_size), jnp.float32)
    w1, b1 = init_linear_params(k1, input_size, hidden_size)
    w2, b2 = init_linear_params(k2, hidden_size, output_size)

    ref = jnp.maximum(x @ w1.T + b1, 0.0) @ w2.T + b2

    fwd = jax.jit(centroid_nn_forward,
                  static_argnames=("block_batch", "out_dtype"))

    # Exact-precision path (f32 operands): validates packed semantics tightly.
    params_f32 = prepare_params(w1, b1, w2, b2, compute_dtype=jnp.float32)
    out_f32 = fwd(x, params_f32, block_batch=64)
    jax.block_until_ready(out_f32)
    assert out_f32.shape == (batch, output_size)
    assert out_f32.dtype == jnp.float32
    assert jnp.allclose(out_f32, ref, atol=1e-5, rtol=1e-5)

    # Default bf16-operand path with bf16 x and bf16 output (halves the
    # dominant HBM read/write streams); loose tolerance by design.
    params = prepare_params(w1, b1, w2, b2)          # bf16 operands by default
    out_bf = fwd(x.astype(jnp.bfloat16), params, block_batch=64)
    jax.block_until_ready(out_bf)
    assert out_bf.shape == (batch, output_size)
    assert out_bf.dtype == jnp.bfloat16
    assert jnp.allclose(out_bf.astype(jnp.float32), ref, atol=1e-1, rtol=1e-1)

    print("KERNEL_OK")
</pallas_src>

<mosaic_0001>
module attributes {stable_mosaic.version = 11 : i64} {
  func.func @centroid_kernel(%arg0: i32, %arg1: memref<8x256xf32, #tpu.memory_space<vmem>>, %arg2: memref<256x512xf32, #tpu.memory_space<vmem>>, %arg3: memref<1x512xf32, #tpu.memory_space<vmem>>, %arg4: memref<512x128xf32, #tpu.memory_space<vmem>>, %arg5: memref<1x128xf32, #tpu.memory_space<vmem>>, %arg6: memref<8x128xf32, #tpu.memory_space<vmem>>) attributes {dimension_semantics = [#tpu.dimension_semantics<parallel>], iteration_bounds = array<i64: 4>, scalar_prefetch = 0 : i64, scratch_operands = 0 : i64, tpu.core_type = #tpu.core_type<tc>, window_params = [{transform_indices = @transform_0, window_bounds = array<i64: 8, 256>}, {pipeline_mode = #tpu.pipeline_mode<synchronous>, transform_indices = @transform_1, window_bounds = array<i64: 256, 512>}, {pipeline_mode = #tpu.pipeline_mode<synchronous>, transform_indices = @transform_2, window_bounds = array<i64: 1, 512>}, {pipeline_mode = #tpu.pipeline_mode<synchronous>, transform_indices = @transform_3, window_bounds = array<i64: 512, 128>}, {pipeline_mode = #tpu.pipeline_mode<synchronous>, transform_indices = @transform_4, window_bounds = array<i64: 1, 128>}, {transform_indices = @transform_5, window_bounds = array<i64: 8, 128>}]} {
    %c0 = arith.constant 0 : index
    %c0_0 = arith.constant 0 : index
    %0 = vector.load %arg1[%c0, %c0_0] : memref<8x256xf32, #tpu.memory_space<vmem>>, vector<8x256xf32>
    %c0_1 = arith.constant 0 : index
    %c0_2 = arith.constant 0 : index
    %1 = vector.load %arg2[%c0_1, %c0_2] : memref<256x512xf32, #tpu.memory_space<vmem>>, vector<256x512xf32>
    %cst = arith.constant dense<0.000000e+00> : vector<8x512xf32>
    %2 = tpu.matmul %0, %1, %cst {dimension_numbers = #tpu.dot_dimension_numbers<[1], [0], [0], [1], [0, 0, 1, 1], [], []>} : vector<8x256xf32>, vector<256x512xf32>, vector<8x512xf32> -> vector<8x512xf32>
    %c0_3 = arith.constant 0 : index
    %c0_4 = arith.constant 0 : index
    %3 = vector.load %arg3[%c0_3, %c0_4] : memref<1x512xf32, #tpu.memory_space<vmem>>, vector<1x512xf32>
    %4 = vector.broadcast %3 : vector<1x512xf32> to vector<8x512xf32>
    %5 = arith.addf %2, %4 : vector<8x512xf32>
    %cst_5 = arith.constant 0.000000e+00 : f32
    %6 = vector.broadcast %cst_5 : f32 to vector<8x512xf32>
    %7 = arith.maximumf %5, %6 : vector<8x512xf32>
    %c0_6 = arith.constant 0 : index
    %c0_7 = arith.constant 0 : index
    %8 = vector.load %arg4[%c0_6, %c0_7] : memref<512x128xf32, #tpu.memory_space<vmem>>, vector<512x128xf32>
    %cst_8 = arith.constant dense<0.000000e+00> : vector<8x128xf32>
    %9 = tpu.matmul %7, %8, %cst_8 {dimension_numbers = #tpu.dot_dimension_numbers<[1], [0], [0], [1], [0, 0, 1, 1], [], []>} : vector<8x512xf32>, vector<512x128xf32>, vector<8x128xf32> -> vector<8x128xf32>
    %c0_9 = arith.constant 0 : index
    %c0_10 = arith.constant 0 : index
    %10 = vector.load %arg5[%c0_9, %c0_10] : memref<1x128xf32, #tpu.memory_space<vmem>>, vector<1x128xf32>
    %11 = vector.broadcast %10 : vector<1x128xf32> to vector<8x128xf32>
    %12 = arith.addf %9, %11 : vector<8x128xf32>
    %c0_11 = arith.constant 0 : index
    %c0_12 = arith.constant 0 : index
    %13 = vector.load %arg6[%c0_11, %c0_12] : memref<8x128xf32, #tpu.memory_space<vmem>>, vector<8x128xf32>
    tpu.vector_store %arg6[%c0_11, %c0_12], %12 {strides = array<i32>} : memref<8x128xf32, #tpu.memory_space<vmem>>, vector<8x128xf32>,
    return
  }
  func.func @transform_0(%arg0: i32) -> (i32, i32) {
    %c0_i32 = arith.constant 0 : i32
    %c0_i32_0 = arith.constant 0 : i32
    return %arg0, %c0_i32 : i32, i32
  }
  func.func @transform_1(%arg0: i32) -> (i32, i32) {
    %c0_i32 = arith.constant 0 : i32
    %c0_i32_0 = arith.constant 0 : i32
    %c0_i32_1 = arith.constant 0 : i32
    return %c0_i32, %c0_i32_0 : i32, i32
  }
  func.func @transform_2(%arg0: i32) -> (i32, i32) {
    %c0_i32 = arith.constant 0 : i32
    %c0_i32_0 = arith.constant 0 : i32
    %c0_i32_1 = arith.constant 0 : i32
    return %c0_i32, %c0_i32_0 : i32, i32
  }
  func.func @transform_3(%arg0: i32) -> (i32, i32) {
    %c0_i32 = arith.constant 0 : i32
    %c0_i32_0 = arith.constant 0 : i32
    %c0_i32_1 = arith.constant 0 : i32
    return %c0_i32, %c0_i32_0 : i32, i32
  }
  func.func @transform_4(%arg0: i32) -> (i32, i32) {
    %c0_i32 = arith.constant 0 : i32
    %c0_i32_0 = arith.constant 0 : i32
    %c0_i32_1 = arith.constant 0 : i32
    return %c0_i32, %c0_i32_0 : i32, i32
  }
  func.func @transform_5(%arg0: i32) -> (i32, i32) {
    %c0_i32 = arith.constant 0 : i32
    %c0_i32_0 = arith.constant 0 : i32
    return %arg0, %c0_i32 : i32, i32
  }
}

</mosaic_0001>

<llo_original>
// kernel: centroid_nn_forward.1
$region0: #{centroid_nn_forward.1}
  #allocation0 [shape = 'u32[]', space=smem, size = 0x4, offset = 0x4, fixed_abs, tag = 'smem constant byte address 0x4 - core index']
  #allocation1 [shape = 'u32[144,128]{1,0:T(1,128)}', space=vmem, size = 0x12000, scoped, tag = 'internal scratch']
  %s0 = inlined_call_operand.vmem [shape: f32[25,256], index: 0, kind: input, shape index: {}]
  %s1 = inlined_call_operand.hbm [shape: f32[256,512], index: 1, kind: input, shape index: {}]
  %s2 = inlined_call_operand.vmem [shape: f32[1,512], index: 2, kind: input, shape index: {}]
  %s3 = inlined_call_operand.vmem [shape: f32[512,128], index: 3, kind: input, shape index: {}]
  %s4 = inlined_call_operand.vmem [shape: f32[1,128], index: 4, kind: input, shape index: {}]
  %s5 = inlined_call_operand.vmem [shape: f32[25,128], index: 5, kind: output, shape index: {}]
  %s6 = sld [smem:[#allocation0]]
  $region57: #{centroid_nn_forward.1} parent=0
    _
  %s8 = ssub.s32 1, %s6
  %s9 = scalar_select 0, %s8, %s6
  $region1: #{centroid_nn_forward.1} parent=0
    #allocation2 [shape = 'u8[524288]{0}', space=vmem, size = 0x80000, scoped, tag = 'input window, operand 1, single buffered']
    #allocation3 [shape = 's32[2]{0}', space=sflag, size = 0x8, scoped, tag = 'scoped memory for centroid_nn_forward.1']
    %10 = vsyncpa [#allocation3], 0
    loop: start=0, step=1, limit=6
    $region2: #{centroid_nn_forward.1} parent=1 // loop_pre_header
      _
    $region3: #{centroid_nn_forward.1} parent=1 // loop_header
      %s12 = sphi 0, %s16
      %p13 = scmp.ge.s32.totalorder %s12, 6
      %s22 = sphi 0, %s24
      %s25 = sphi 0, %s22
      %s26 = sphi 0, %s25
      %s42 = sphi 0, %s26
      %s46 = sphi 0, %s46
      %s48 = sphi 0, %s46
      %s49 = sphi 0, %s48
      %s63 = sphi 0, %s49
      %s67 = sphi 0, %s67
      %s69 = sphi 0, %s67
      %s70 = sphi 0, %s69
      %s84 = sphi 0, %s70
      %s88 = sphi 0, %s88
      %s90 = sphi 0, %s88
      %s91 = sphi 0, %s90
      %s105 = sphi 0, %s91
      %s109 = sphi 0, %s109
      %s111 = sphi 0, %s109
      %s112 = sphi 0, %s111
      %s126 = sphi 0, %s112
      %s132 = sphi 0, %s134
      %s135 = sphi 0, %s132
      %s136 = sphi 0, %s135
      %s152 = sphi 0, %s136
    $region4: #{centroid_nn_forward.1} parent=1 // loop_header_branch
      %15 = sbr.rel (%p13) target = $region8
    $region5: #{centroid_nn_forward.1} parent=1 // loop_body
      %s17 = ssub.s32 %s12, 1
      %s18 = ssub.s32 %s12, 2
      %s19 = sadd.s32 %s12, 1
      %s20 = ssub.s32 %s12, %s19
      %p21 = scmp.eq.s32.totalorder %s20, 0
      %s23 = sadd.s32 %s22, 1
      %s24 = scalar_select %p21, %s22, %s23
      %p27 = pneg %p21
      %p28 = scmp.eq.s32.totalorder %s12, 3
      %p29 = por %p27, %p28
      %p30 = scmp.ne.s32.totalorder %s22, %s25
      %p31 = scmp.eq.s32.totalorder %s12, 0
      %p32 = por %p30, %p31
      %p33 = scmp.ne.s32.totalorder %s22, %s25
      %p34 = scmp.eq.s32.totalorder %s17, 3
      %p35 = por %p33, %p34
      %p36 = scmp.ne.s32.totalorder %s25, %s26
      %p37 = scmp.eq.s32.totalorder %s17, 0
      %p38 = por %p36, %p37
      %p39 = scmp.ne.s32.totalorder %s25, %s26
      %p40 = scmp.eq.s32.totalorder %s18, 3
      %p41 = por %p39, %p40
      %p43 = scmp.ne.s32.totalorder %s26, %s42
      %p44 = scmp.eq.s32.totalorder %s18, 0
      %p45 = por %p43, %p44
      %s47 = sadd.s32 %s46, 1
      %p50 = scmp.eq.s32.totalorder %s12, 3
      %p51 = scmp.ne.s32.totalorder %s46, %s48
      %p52 = scmp.eq.s32.totalorder %s12, 0
      %p53 = por %p51, %p52
      %p54 = scmp.ne.s32.totalorder %s46, %s48
      %p55 = scmp.eq.s32.totalorder %s17, 3
      %p56 = por %p54, %p55
      %p57 = scmp.ne.s32.totalorder %s48, %s49
      %p58 = scmp.eq.s32.totalorder %s17, 0
      %p59 = por %p57, %p58
      %p60 = scmp.ne.s32.totalorder %s48, %s49
      %p61 = scmp.eq.s32.totalorder %s18, 3
      %p62 = por %p60, %p61
      %p64 = scmp.ne.s32.totalorder %s49, %s63
      %p65 = scmp.eq.s32.totalorder %s18, 0
      %p66 = por %p64, %p65
      %s68 = sadd.s32 %s67, 1
      %p71 = scmp.eq.s32.totalorder %s12, 3
      %p72 = scmp.ne.s32.totalorder %s67, %s69
      %p73 = scmp.eq.s32.totalorder %s12, 0
      %p74 = por %p72, %p73
      %p75 = scmp.ne.s32.totalorder %s67, %s69
      %p76 = scmp.eq.s32.totalorder %s17, 3
      %p77 = por %p75, %p76
      %p78 = scmp.ne.s32.totalorder %s69, %s70
      %p79 = scmp.eq.s32.totalorder %s17, 0
      %p80 = por %p78, %p79
      %p81 = scmp.ne.s32.totalorder %s69, %s70
      %p82 = scmp.eq.s32.totalorder %s18, 3
      %p83 = por %p81, %p82
      %p85 = scmp.ne.s32.totalorder %s70, %s84
      %p86 = scmp.eq.s32.totalorder %s18, 0
      %p87 = por %p85, %p86
      %s89 = sadd.s32 %s88, 1
      %p92 = scmp.eq.s32.totalorder %s12, 3
      %p93 = scmp.ne.s32.totalorder %s88, %s90
      %p94 = scmp.eq.s32.totalorder %s12, 0
      %p95 = por %p93, %p94
      %p96 = scmp.ne.s32.totalorder %s88, %s90
      %p97 = scmp.eq.s32.totalorder %s17, 3
      %p98 = por %p96, %p97
      %p99 = scmp.ne.s32.totalorder %s90, %s91
      %p100 = scmp.eq.s32.totalorder %s17, 0
      %p101 = por %p99, %p100
      %p102 = scmp.ne.s32.totalorder %s90, %s91
      %p103 = scmp.eq.s32.totalorder %s18, 3
      %p104 = por %p102, %p103
      %p106 = scmp.ne.s32.totalorder %s91, %s105
      %p107 = scmp.eq.s32.totalorder %s18, 0
      %p108 = por %p106, %p107
      %s110 = sadd.s32 %s109, 1
      %p113 = scmp.eq.s32.totalorder %s12, 3
      %p114 = scmp.ne.s32.totalorder %s109, %s111
      %p115 = scmp.eq.s32.totalorder %s12, 0
      %p116 = por %p114, %p115
      %p117 = scmp.ne.s32.totalorder %s109, %s111
      %p118 = scmp.eq.s32.totalorder %s17, 3
      %p119 = por %p117, %p118
      %p120 = scmp.ne.s32.totalorder %s111, %s112
      %p121 = scmp.eq.s32.totalorder %s17, 0
      %p122 = por %p120, %p121
      %p123 = scmp.ne.s32.totalorder %s111, %s112
      %p124 = scmp.eq.s32.totalorder %s18, 3
      %p125 = por %p123, %p124
      %p127 = scmp.ne.s32.totalorder %s112, %s126
      %p128 = scmp.eq.s32.totalorder %s18, 0
      %p129 = por %p127, %p128
      %s130 = ssub.s32 %s12, %s19
      %p131 = scmp.eq.s32.totalorder %s130, 0
      %s133 = sadd.s32 %s132, 1
      %s134 = scalar_select %p131, %s132, %s133
      %p137 = pneg %p131
      %p138 = scmp.eq.s32.totalorder %s12, 3
      %p139 = por %p137, %p138
      %p140 = scmp.ne.s32.totalorder %s132, %s135
      %p141 = scmp.eq.s32.totalorder %s12, 0
      %p142 = por %p140, %p141
      %p143 = scmp.ne.s32.totalorder %s132, %s135
      %p144 = scmp.eq.s32.totalorder %s17, 3
      %p145 = por %p143, %p144
      %p146 = scmp.ne.s32.totalorder %s135, %s136
      %p147 = scmp.eq.s32.totalorder %s17, 0
      %p148 = por %p146, %p147
      %p149 = scmp.ne.s32.totalorder %s135, %s136
      %p150 = scmp.eq.s32.totalorder %s18, 3
      %p151 = por %p149, %p150
      %p153 = scmp.ne.s32.totalorder %s136, %s152
      %p154 = scmp.eq.s32.totalorder %s18, 0
      %p155 = por %p153, %p154
      %p156 = scmp.le.s32.totalorder 1, %s12
      %p157 = scmp.lt.s32.totalorder %s12, 5
      %p158 = pnand %p156, %p157
      %p159 = pneg %p158
      // Predicated region
      $region9: #{centroid_nn_forward.1} parent=5 // pred_check
        _
      $region10: #{centroid_nn_forward.1} parent=5 // pred_check_branch
        %161 = sbr.rel (%p158) target = $region12
      $region11: #{centroid_nn_forward.1} parent=5 // pred_region
        %s162 = ssub.s32 %s12, 1
        // Predicated region
        $region13: #{centroid_nn_forward.1} parent=11 // pred_check
          %p163 = pneg %p59
        $region14: #{centroid_nn_forward.1} parent=11 // pred_check_branch
          %165 = sbr.rel (%p163) target = $region16
        $region15: #{centroid_nn_forward.1} parent=11 // pred_region
          %s167 = ssub.s32 16384, 16384
          %168 = vsyncadd [#allocation3], %s167
          %s169 = sshll.u32 [#allocation2], 4
          %s170 = int_to_ptr.vmem [resolvable:$true] %s169
          %175 = dma.hbm_to_vmem [thread:$0]  %s1, 16384, %s170, [#allocation3], 512, 512, 32
        $region16: #{centroid_nn_forward.1} parent=11 // pred_fallthru
          _
        // Predicated region
        $region17: #{centroid_nn_forward.1} parent=11 // pred_check
          %p176 = pneg %p80
        $region18: #{centroid_nn_forward.1} parent=11 // pred_check_branch
          %178 = sbr.rel (%p176) target = $region20
        $region19: #{centroid_nn_forward.1} parent=11 // pred_region
          _
        $region20: #{centroid_nn_forward.1} parent=11 // pred_fallthru
          _
        // Predicated region
        $region21: #{centroid_nn_forward.1} parent=11 // pred_check
          %p179 = pneg %p101
        $region22: #{centroid_nn_forward.1} parent=11 // pred_check_branch
          %181 = sbr.rel (%p179) target = $region24
        $region23: #{centroid_nn_forward.1} parent=11 // pred_region
          _
        $region24: #{centroid_nn_forward.1} parent=11 // pred_fallthru
          _
        // Predicated region
        $region25: #{centroid_nn_forward.1} parent=11 // pred_check
          %p182 = pneg %p122
        $region26: #{centroid_nn_forward.1} parent=11 // pred_check_branch
          %184 = sbr.rel (%p182) target = $region28
        $region27: #{centroid_nn_forward.1} parent=11 // pred_region
          _
        $region28: #{centroid_nn_forward.1} parent=11 // pred_fallthru
          _
      $region12: #{centroid_nn_forward.1} parent=5 // pred_fallthru
        _
      %p185 = scmp.lt.s32.totalorder %s12, 4
      // Predicated region
      $region29: #{centroid_nn_forward.1} parent=5 // pred_check
        %p186 = pneg %p185
      $region30: #{centroid_nn_forward.1} parent=5 // pred_check_branch
        %188 = sbr.rel (%p186) target = $region32
      $region31: #{centroid_nn_forward.1} parent=5 // pred_region
        // Predicated region
        $region33: #{centroid_nn_forward.1} parent=31 // pred_check
          %p189 = pneg %p32
        $region34: #{centroid_nn_forward.1} parent=31 // pred_check_branch
          %191 = sbr.rel (%p189) target = $region36
        $region35: #{centroid_nn_forward.1} parent=31 // pred_region
          %p192 = scmp.lt.s32.totalorder %s12, 3
          %s193 = scalar_select %p192, %s12, 3
          %s194 = smul.addr %s193, 2
          %s195 = smul.addr %s194, 8
          %s196 = scalar_lea.vmem %s0, %s195
        $region36: #{centroid_nn_forward.1} parent=31 // pred_fallthru
          _
      $region32: #{centroid_nn_forward.1} parent=5 // pred_fallthru
        _
      %p197 = scmp.le.s32.totalorder 1, %s12
      %p198 = scmp.lt.s32.totalorder %s12, 5
      %p199 = pnand %p197, %p198
      %p200 = pneg %p199
      // Predicated region
      $region37: #{centroid_nn_forward.1} parent=5 // pred_check
        _
      $region38: #{centroid_nn_forward.1} parent=5 // pred_check_branch
        %202 = sbr.rel (%p199) target = $region40
      $region39: #{centroid_nn_forward.1} parent=5 // pred_region
        %s203 = ssub.s32 %s12, 1
        // Predicated region
        $region41: #{centroid_nn_forward.1} parent=39 // pred_check
          %p204 = pneg %p59
        $region42: #{centroid_nn_forward.1} parent=39 // pred_check_branch
          %206 = sbr.rel (%p204) target = $region44
        $region43: #{centroid_nn_forward.1} parent=39 // pred_region
          %207 = dma.done [#allocation3], 16384
        $region44: #{centroid_nn_forward.1} parent=39 // pred_fallthru
          _
        %p208 = scmp.lt.s32.totalorder %s17, 3
        %s209 = scalar_select %p208, %s17, 3
        %s210 = smul.addr %s209, 2
        %s211 = smul.addr %s210, 8
        %s212 = scalar_lea.vmem %s0, %s211
        %p213 = pneg %p38
        %p214 = pneg %p35
        %p215 = pneg %p59
        %p216 = pneg %p56
        %p217 = pneg %p80
        %p218 = pneg %p77
        %p219 = pneg %p101
        %p220 = pneg %p98
        %p221 = pneg %p122
        %p222 = pneg %p119
        %p223 = pneg %p148
        %p224 = pneg %p145
        %p225 = scmp.lt.s32.totalorder %s17, 3
        %s226 = scalar_select %p225, %s17, 3
        %s227 = smul.addr %s226, 8
        %s228 = scalar_lea.vmem %s5, %s227
        %p229 = scmp.lt.s32.totalorder %s17, 3
        %s230 = scalar_select %p229, %s17, 3
        %s231 = smul.addr %s230, 2
        %s232 = smul.addr %s231, 8
        %s233 = scalar_lea.vmem %s0, %s232
        %p234 = scmp.lt.s32.totalorder %s17, 3
        %s235 = scalar_select %p234, %s17, 3
        %s236 = smul.addr %s235, 8
        %s237 = scalar_lea.vmem %s5, %s236
        %v238 = vld [vmem:[%s233] sm:$0xff]
        %v239 = vld [vmem:[%s233 + $0x8] sm:$0xff]
        %v240 = vld [vmem:[#allocation2] sm:$0xff]
        %v241 = vld [vmem:[#allocation2 + $0x8] sm:$0xff]
        %v242 = vld [vmem:[#allocation2 + $0x10] sm:$0xff]
        %v243 = vld [vmem:[#allocation2 + $0x18] sm:$0xff]
        %v244 = vld [vmem:[#allocation2 + $0x20] sm:$0xff]
        %v245 = vld [vmem:[#allocation2 + $0x28] sm:$0xff]
        %v246 = vld [vmem:[#allocation2 + $0x30] sm:$0xff]
        %v247 = vld [vmem:[#allocation2 + $0x38] sm:$0xff]
        %v248 = vld [vmem:[#allocation2 + $0x40] sm:$0xff]
        %v249 = vld [vmem:[#allocation2 + $0x48] sm:$0xff]
        %v250 = vld [vmem:[#allocation2 + $0x50] sm:$0xff]
        %v251 = vld [vmem:[#allocation2 + $0x58] sm:$0xff]
        %v252 = vld [vmem:[#allocation2 + $0x60] sm:$0xff]
        %v253 = vld [vmem:[#allocation2 + $0x68] sm:$0xff]
        %v254 = vld [vmem:[#allocation2 + $0x70] sm:$0xff]
        %v255 = vld [vmem:[#allocation2 + $0x78] sm:$0xff]
        %v256 = vld [vmem:[#allocation2 + $0x80] sm:$0xff]
        %v257 = vld [vmem:[#allocation2 + $0x88] sm:$0xff]
        %v258 = vld [vmem:[#allocation2 + $0x90] sm:$0xff]
        %v259 = vld [vmem:[#allocation2 + $0x98] sm:$0xff]
        %v260 = vld [vmem:[#allocation2 + $0xa0] sm:$0xff]
        %v261 = vld [vmem:[#allocation2 + $0xa8] sm:$0xff]
        %v262 = vld [vmem:[#allocation2 + $0xb0] sm:$0xff]
        %v263 = vld [vmem:[#allocation2 + $0xb8] sm:$0xff]
        %v264 = vld [vmem:[#allocation2 + $0xc0] sm:$0xff]
        %v265 = vld [vmem:[#allocation2 + $0xc8] sm:$0xff]
        %v266 = vld [vmem:[#allocation2 + $0xd0] sm:$0xff]
        %v267 = vld [vmem:[#allocation2 + $0xd8] sm:$0xff]
        %v268 = vld [vmem:[#allocation2 + $0xe0] sm:$0xff]
        %v269 = vld [vmem:[#allocation2 + $0xe8] sm:$0xff]
        %v270 = vld [vmem:[#allocation2 + $0xf0] sm:$0xff]
        %v271 = vld [vmem:[#allocation2 + $0xf8] sm:$0xff]
        %v272 = vld [vmem:[#allocation2 + $0x100] sm:$0xff]
        %v273 = vld [vmem:[#allocation2 + $0x108] sm:$0xff]
        %v274 = vld [vmem:[#allocation2 + $0x110] sm:$0xff]
        %v275 = vld [vmem:[#allocation2 + $0x118] sm:$0xff]
        %v276 = vld [vmem:[#allocation2 + $0x120] sm:$0xff]
        %v277 = vld [vmem:[#allocation2 + $0x128] sm:$0xff]
        %v278 = vld [vmem:[#allocation2 + $0x130] sm:$0xff]
        %v279 = vld [vmem:[#allocation2 + $0x138] sm:$0xff]
        %v280 = vld [vmem:[#allocation2 + $0x140] sm:$0xff]
        %v281 = vld [vmem:[#allocation2 + $0x148] sm:$0xff]
        %v282 = vld [vmem:[#allocation2 + $0x150] sm:$0xff]
        %v283 = vld [vmem:[#allocation2 + $0x158] sm:$0xff]
        %v284 = vld [vmem:[#allocation2 + $0x160] sm:$0xff]
        %v285 = vld [vmem:[#allocation2 + $0x168] sm:$0xff]
        %v286 = vld [vmem:[#allocation2 + $0x170] sm:$0xff]
        %v287 = vld [vmem:[#allocation2 + $0x178] sm:$0xff]
        %v288 = vld [vmem:[#allocation2 + $0x180] sm:$0xff]
        %v289 = vld [vmem:[#allocation2 + $0x188] sm:$0xff]
        %v290 = vld [vmem:[#allocation2 + $0x190] sm:$0xff]
        %v291 = vld [vmem:[#allocation2 + $0x198] sm:$0xff]
        %v292 = vld [vmem:[#allocation2 + $0x1a0] sm:$0xff]
        %v293 = vld [vmem:[#allocation2 + $0x1a8] sm:$0xff]
        %v294 = vld [vmem:[#allocation2 + $0x1b0] sm:$0xff]
        %v295 = vld [vmem:[#allocation2 + $0x1b8] sm:$0xff]
        %v296 = vld [vmem:[#allocation2 + $0x1c0] sm:$0xff]
        %v297 = vld [vmem:[#allocation2 + $0x1c8] sm:$0xff]
        %v298 = vld [vmem:[#allocation2 + $0x1d0] sm:$0xff]
        %v299 = vld [vmem:[#allocation2 + $0x1d8] sm:$0xff]
        %v300 = vld [vmem:[#allocation2 + $0x1e0] sm:$0xff]
        %v301 = vld [vmem:[#allocation2 + $0x1e8] sm:$0xff]
        %v302 = vld [vmem:[#allocation2 + $0x1f0] sm:$0xff]
        %v303 = vld [vmem:[#allocation2 + $0x1f8] sm:$0xff]
        %v304 = vld [vmem:[#allocation2 + $0x200] sm:$0xff]
        %v305 = vld [vmem:[#allocation2 + $0x208] sm:$0xff]
        %v306 = vld [vmem:[#allocation2 + $0x210] sm:$0xff]
        %v307 = vld [vmem:[#allocation2 + $0x218] sm:$0xff]
        %v308 = vld [vmem:[#allocation2 + $0x220] sm:$0xff]
        %v309 = vld [vmem:[#allocation2 + $0x228] sm:$0xff]
        %v310 = vld [vmem:[#allocation2 + $0x230] sm:$0xff]
        %v311 = vld [vmem:[#allocation2 + $0x238] sm:$0xff]
        %v312 = vld [vmem:[#allocation2 + $0x240] sm:$0xff]
        %v313 = vld [vmem:[#allocation2 + $0x248] sm:$0xff]
        %v314 = vld [vmem:[#allocation2 + $0x250] sm:$0xff]
        %v315 = vld [vmem:[#allocation2 + $0x258] sm:$0xff]
        %v316 = vld [vmem:[#allocation2 + $0x260] sm:$0xff]
        %v317 = vld [vmem:[#allocation2 + $0x268] sm:$0xff]
        %v318 = vld [vmem:[#allocation2 + $0x270] sm:$0xff]
        %v319 = vld [vmem:[#allocation2 + $0x278] sm:$0xff]
        %v320 = vld [vmem:[#allocation2 + $0x280] sm:$0xff]
        %v321 = vld [vmem:[#allocation2 + $0x288] sm:$0xff]
        %v322 = vld [vmem:[#allocation2 + $0x290] sm:$0xff]
        %v323 = vld [vmem:[#allocation2 + $0x298] sm:$0xff]
        %v324 = vld [vmem:[#allocation2 + $0x2a0] sm:$0xff]
        %v325 = vld [vmem:[#allocation2 + $0x2a8] sm:$0xff]
        %v326 = vld [vmem:[#allocation2 + $0x2b0] sm:$0xff]
        %v327 = vld [vmem:[#allocation2 + $0x2b8] sm:$0xff]
        %v328 = vld [vmem:[#allocation2 + $0x2c0] sm:$0xff]
        %v329 = vld [vmem:[#allocation2 + $0x2c8] sm:$0xff]
        %v330 = vld [vmem:[#allocation2 + $0x2d0] sm:$0xff]
        %v331 = vld [vmem:[#allocation2 + $0x2d8] sm:$0xff]
        %v332 = vld [vmem:[#allocation2 + $0x2e0] sm:$0xff]
        %v333 = vld [vmem:[#allocation2 + $0x2e8] sm:$0xff]
        %v334 = vld [vmem:[#allocation2 + $0x2f0] sm:$0xff]
        %v335 = vld [vmem:[#allocation2 + $0x2f8] sm:$0xff]
        %v336 = vld [vmem:[#allocation2 + $0x300] sm:$0xff]
        %v337 = vld [vmem:[#allocation2 + $0x308] sm:$0xff]
        %v338 = vld [vmem:[#allocation2 + $0x310] sm:$0xff]
        %v339 = vld [vmem:[#allocation2 + $0x318] sm:$0xff]
        %v340 = vld [vmem:[#allocation2 + $0x320] sm:$0xff]
        %v341 = vld [vmem:[#allocation2 + $0x328] sm:$0xff]
        %v342 = vld [vmem:[#allocation2 + $0x330] sm:$0xff]
        %v343 = vld [vmem:[#allocation2 + $0x338] sm:$0xff]
        %v344 = vld [vmem:[#allocation2 + $0x340] sm:$0xff]
        %v345 = vld [vmem:[#allocation2 + $0x348] sm:$0xff]
        %v346 = vld [vmem:[#allocation2 + $0x350] sm:$0xff]
        %v347 = vld [vmem:[#allocation2 + $0x358] sm:$0xff]
        %v348 = vld [vmem:[#allocation2 + $0x360] sm:$0xff]
        %v349 = vld [vmem:[#allocation2 + $0x368] sm:$0xff]
        %v350 = vld [vmem:[#allocation2 + $0x370] sm:$0xff]
        %v351 = vld [vmem:[#allocation2 + $0x378] sm:$0xff]
        %v352 = vld [vmem:[#allocation2 + $0x380] sm:$0xff]
        %v353 = vld [vmem:[#allocation2 + $0x388] sm:$0xff]
        %v354 = vld [vmem:[#allocation2 + $0x390] sm:$0xff]
        %v355 = vld [vmem:[#allocation2 + $0x398] sm:$0xff]
        %v356 = vld [vmem:[#allocation2 + $0x3a0] sm:$0xff]
        %v357 = vld [vmem:[#allocation2 + $0x3a8] sm:$0xff]
        %v358 = vld [vmem:[#allocation2 + $0x3b0] sm:$0xff]
        %v359 = vld [vmem:[#allocation2 + $0x3b8] sm:$0xff]
        %v360 = vld [vmem:[#allocation2 + $0x3c0] sm:$0xff]
        %v361 = vld [vmem:[#allocation2 + $0x3c8] sm:$0xff]
        %v362 = vld [vmem:[#allocation2 + $0x3d0] sm:$0xff]
        %v363 = vld [vmem:[#allocation2 + $0x3d8] sm:$0xff]
        %v364 = vld [vmem:[#allocation2 + $0x3e0] sm:$0xff]
        %v365 = vld [vmem:[#allocation2 + $0x3e8] sm:$0xff]
        %v366 = vld [vmem:[#allocation2 + $0x3f0] sm:$0xff]
        %v367 = vld [vmem:[#allocation2 + $0x3f8] sm:$0xff]
        %v368 = vld [vmem:[%s2] sm:$0xf]
        %v370 = vlaneseq
        %v371 = vshrl.u32 %v370, 7
        %v372 = vsub.s32 0, %v371
        %v373 = vrot.slane %v368, %v372
        %v374 = vlaneseq
        %v375 = vshrl.u32 %v374, 7
        %v376 = vsub.s32 1, %v375
        %v377 = vrot.slane %v368, %v376
        %v378 = vlaneseq
        %v379 = vshrl.u32 %v378, 7
        %v380 = vsub.s32 2, %v379
        %v381 = vrot.slane %v368, %v380
        %v382 = vlaneseq
        %v383 = vshrl.u32 %v382, 7
        %v384 = vsub.s32 3, %v383
        %v385 = vrot.slane %v368, %v384
        %390 = vmatprep.subr.mxu0 %v301
        %391 = vmatpush1.msra.mxu0 %v300
        %392 = vmatprep.subr.mxu0 %v297
        %393 = vmatpush1.msra.mxu0 %v296
        %394 = vmatprep.subr.mxu0 %v293
        %395 = vmatpush1.msra.mxu0 %v292
        %396 = vmatprep.subr.mxu0 %v289
        %397 = vmatpush1.msra.mxu0 %v288
        %398 = vmatprep.subr.mxu0 %v285
        %399 = vmatpush1.msra.mxu0 %v284
        %400 = vmatprep.subr.mxu0 %v281
        %401 = vmatpush1.msra.mxu0 %v280
        %402 = vmatprep.subr.mxu0 %v277
        %403 = vmatpush1.msra.mxu0 %v276
        %404 = vmatprep.subr.mxu0 %v273
        %405 = vmatpush1.msra.mxu0 %v272
        %406 = vmatprep.subr.mxu0 %v269
        %407 = vmatpush1.msra.mxu0 %v268
        %408 = vmatprep.subr.mxu0 %v265
        %409 = vmatpush1.msra.mxu0 %v264
        %410 = vmatprep.subr.mxu0 %v261
        %411 = vmatpush1.msra.mxu0 %v260
        %412 = vmatprep.subr.mxu0 %v257
        %413 = vmatpush1.msra.mxu0 %v256
        %414 = vmatprep.subr.mxu0 %v253
        %415 = vmatpush1.msra.mxu0 %v252
        %416 = vmatprep.subr.mxu0 %v249
        %417 = vmatpush1.msra.mxu0 %v248
        %418 = vmatprep.subr.mxu0 %v245
        %419 = vmatpush1.msra.mxu0 %v244
        %420 = vmatprep.subr.mxu0 %v241
        %421 = vmatpush1.msra.mxu0 %v240
        %422 = vmatprep.subr.mxu0 %v365
        %423 = vmatpush2.msra.mxu0 %v364
        %424 = vmatprep.subr.mxu0 %v361
        %425 = vmatpush2.msra.mxu0 %v360
        %426 = vmatprep.subr.mxu0 %v357
        %427 = vmatpush2.msra.mxu0 %v356
        %428 = vmatprep.subr.mxu0 %v353
        %429 = vmatpush2.msra.mxu0 %v352
        %430 = vmatprep.subr.mxu0 %v349
        %431 = vmatpush2.msra.mxu0 %v348
        %432 = vmatprep.subr.mxu0 %v345
        %433 = vmatpush2.msra.mxu0 %v344
        %434 = vmatprep.subr.mxu0 %v341
        %435 = vmatpush2.msra.mxu0 %v340
        %436 = vmatprep.subr.mxu0 %v337
        %437 = vmatpush2.msra.mxu0 %v336
        %438 = vmatprep.subr.mxu0 %v333
        %439 = vmatpush2.msra.mxu0 %v332
        %440 = vmatprep.subr.mxu0 %v329
        %441 = vmatpush2.msra.mxu0 %v328
        %442 = vmatprep.subr.mxu0 %v325
        %443 = vmatpush2.msra.mxu0 %v324
        %444 = vmatprep.subr.mxu0 %v321
        %445 = vmatpush2.msra.mxu0 %v320
        %446 = vmatprep.subr.mxu0 %v317
        %447 = vmatpush2.msra.mxu0 %v316
        %448 = vmatprep.subr.mxu0 %v313
        %449 = vmatpush2.msra.mxu0 %v312
        %450 = vmatprep.subr.mxu0 %v309
        %451 = vmatpush2.msra.mxu0 %v308
        %452 = vmatprep.subr.mxu0 %v305
        %453 = vmatpush2.msra.mxu0 %v304
        %454 = vmatprep.mubr.f32.mxu0 %v239
        %455 = vmatmul.mubr.f32.gmra.mxu0 %v238
        %v456 = vpop.f32.mrf.mxu0
        %v457 = vadd.f32 %v373, %v456
        %v458 = vpop.f32.mrf.mxu0
        %v459 = vadd.f32 %v377, %v458
        %460 = vdwg.mxu0
        %461 = vmatprep.subr.mxu0 %v303
        %462 = vmatpush1.msra.mxu0 %v302
        %463 = vmatprep.subr.mxu0 %v299
        %464 = vmatpush1.msra.mxu0 %v298
        %465 = vmatprep.subr.mxu0 %v295
        %466 = vmatpush1.msra.mxu0 %v294
        %467 = vmatprep.subr.mxu0 %v291
        %468 = vmatpush1.msra.mxu0 %v290
        %469 = vmatprep.subr.mxu0 %v287
        %470 = vmatpush1.msra.mxu0 %v286
        %471 = vmatprep.subr.mxu0 %v283
        %472 = vmatpush1.msra.mxu0 %v282
        %473 = vmatprep.subr.mxu0 %v279
        %474 = vmatpush1.msra.mxu0 %v278
        %475 = vmatprep.subr.mxu0 %v275
        %476 = vmatpush1.msra.mxu0 %v274
        %477 = vmatprep.subr.mxu0 %v271
        %478 = vmatpush1.msra.mxu0 %v270
        %479 = vmatprep.subr.mxu0 %v267
        %480 = vmatpush1.msra.mxu0 %v266
        %481 = vmatprep.subr.mxu0 %v263
        %482 = vmatpush1.msra.mxu0 %v262
        %483 = vmatprep.subr.mxu0 %v259
        %484 = vmatpush1.msra.mxu0 %v258
        %485 = vmatprep.subr.mxu0 %v255
        %486 = vmatpush1.msra.mxu0 %v254
        %487 = vmatprep.subr.mxu0 %v251
        %488 = vmatpush1.msra.mxu0 %v250
        %489 = vmatprep.subr.mxu0 %v247
        %490 = vmatpush1.msra.mxu0 %v246
        %491 = vmatprep.subr.mxu0 %v243
        %492 = vmatpush1.msra.mxu0 %v242
        %493 = vmatprep.subr.mxu0 %v367
        %494 = vmatpush2.msra.mxu0 %v366
        %495 = vmatprep.subr.mxu0 %v363
        %496 = vmatpush2.msra.mxu0 %v362
        %497 = vmatprep.subr.mxu0 %v359
        %498 = vmatpush2.msra.mxu0 %v358
        %499 = vmatprep.subr.mxu0 %v355
        %500 = vmatpush2.msra.mxu0 %v354
        %501 = vmatprep.subr.mxu0 %v351
        %502 = vmatpush2.msra.mxu0 %v350
        %503 = vmatprep.subr.mxu0 %v347
        %504 = vmatpush2.msra.mxu0 %v346
        %505 = vmatprep.subr.mxu0 %v343
        %506 = vmatpush2.msra.mxu0 %v342
        %507 = vmatprep.subr.mxu0 %v339
        %508 = vmatpush2.msra.mxu0 %v338
        %509 = vmatprep.subr.mxu0 %v335
        %510 = vmatpush2.msra.mxu0 %v334
        %511 = vmatprep.subr.mxu0 %v331
        %512 = vmatpush2.msra.mxu0 %v330
        %513 = vmatprep.subr.mxu0 %v327
        %514 = vmatpush2.msra.mxu0 %v326
        %515 = vmatprep.subr.mxu0 %v323
        %516 = vmatpush2.msra.mxu0 %v322
        %517 = vmatprep.subr.mxu0 %v319
        %518 = vmatpush2.msra.mxu0 %v318
        %519 = vmatprep.subr.mxu0 %v315
        %520 = vmatpush2.msra.mxu0 %v314
        %521 = vmatprep.subr.mxu0 %v311
        %522 = vmatpush2.msra.mxu0 %v310
        %523 = vmatprep.subr.mxu0 %v307
        %524 = vmatpush2.msra.mxu0 %v306
        %525 = vmatprep.mubr.f32.mxu0 %v239
        %526 = vmatmul.mubr.f32.gmra.mxu0 %v238
        %v527 = vpop.f32.mrf.mxu0
        %v528 = vadd.f32 %v381, %v527
        %v529 = vpop.f32.mrf.mxu0
        %v530 = vadd.f32 %v385, %v529
        %531 = vdwg.mxu0
        %v532 = vmax.f32 %v457, 0.0
        %v533 = vmax.f32 %v459, 0.0
        %v534 = vmax.f32 %v528, 0.0
        %v535 = vmax.f32 %v530, 0.0
        %v536 = vld [vmem:[%s3] sm:$0xff]
        %v537 = vld [vmem:[%s3 + $0x8] sm:$0xff]
        %v538 = vld [vmem:[%s3 + $0x10] sm:$0xff]
        %v539 = vld [vmem:[%s3 + $0x18] sm:$0xff]
        %v540 = vld [vmem:[%s3 + $0x20] sm:$0xff]
        %v541 = vld [vmem:[%s3 + $0x28] sm:$0xff]
        %v542 = vld [vmem:[%s3 + $0x30] sm:$0xff]
        %v543 = vld [vmem:[%s3 + $0x38] sm:$0xff]
        %v544 = vld [vmem:[%s3 + $0x40] sm:$0xff]
        %v545 = vld [vmem:[%s3 + $0x48] sm:$0xff]
        %v546 = vld [vmem:[%s3 + $0x50] sm:$0xff]
        %v547 = vld [vmem:[%s3 + $0x58] sm:$0xff]
        %v548 = vld [vmem:[%s3 + $0x60] sm:$0xff]
        %v549 = vld [vmem:[%s3 + $0x68] sm:$0xff]
        %v550 = vld [vmem:[%s3 + $0x70] sm:$0xff]
        %v551 = vld [vmem:[%s3 + $0x78] sm:$0xff]
        %v552 = vld [vmem:[%s3 + $0x80] sm:$0xff]
        %v553 = vld [vmem:[%s3 + $0x88] sm:$0xff]
        %v554 = vld [vmem:[%s3 + $0x90] sm:$0xff]
        %v555 = vld [vmem:[%s3 + $0x98] sm:$0xff]
        %v556 = vld [vmem:[%s3 + $0xa0] sm:$0xff]
        %v557 = vld [vmem:[%s3 + $0xa8] sm:$0xff]
        %v558 = vld [vmem:[%s3 + $0xb0] sm:$0xff]
        %v559 = vld [vmem:[%s3 + $0xb8] sm:$0xff]
        %v560 = vld [vmem:[%s3 + $0xc0] sm:$0xff]
        %v561 = vld [vmem:[%s3 + $0xc8] sm:$0xff]
        %v562 = vld [vmem:[%s3 + $0xd0] sm:$0xff]
        %v563 = vld [vmem:[%s3 + $0xd8] sm:$0xff]
        %v564 = vld [vmem:[%s3 + $0xe0] sm:$0xff]
        %v565 = vld [vmem:[%s3 + $0xe8] sm:$0xff]
        %v566 = vld [vmem:[%s3 + $0xf0] sm:$0xff]
        %v567 = vld [vmem:[%s3 + $0xf8] sm:$0xff]
        %v568 = vld [vmem:[%s3 + $0x100] sm:$0xff]
        %v569 = vld [vmem:[%s3 + $0x108] sm:$0xff]
        %v570 = vld [vmem:[%s3 + $0x110] sm:$0xff]
        %v571 = vld [vmem:[%s3 + $0x118] sm:$0xff]
        %v572 = vld [vmem:[%s3 + $0x120] sm:$0xff]
        %v573 = vld [vmem:[%s3 + $0x128] sm:$0xff]
        %v574 = vld [vmem:[%s3 + $0x130] sm:$0xff]
        %v575 = vld [vmem:[%s3 + $0x138] sm:$0xff]
        %v576 = vld [vmem:[%s3 + $0x140] sm:$0xff]
        %v577 = vld [vmem:[%s3 + $0x148] sm:$0xff]
        %v578 = vld [vmem:[%s3 + $0x150] sm:$0xff]
        %v579 = vld [vmem:[%s3 + $0x158] sm:$0xff]
        %v580 = vld [vmem:[%s3 + $0x160] sm:$0xff]
        %v581 = vld [vmem:[%s3 + $0x168] sm:$0xff]
        %v582 = vld [vmem:[%s3 + $0x170] sm:$0xff]
        %v583 = vld [vmem:[%s3 + $0x178] sm:$0xff]
        %v584 = vld [vmem:[%s3 + $0x180] sm:$0xff]
        %v585 = vld [vmem:[%s3 + $0x188] sm:$0xff]
        %v586 = vld [vmem:[%s3 + $0x190] sm:$0xff]
        %v587 = vld [vmem:[%s3 + $0x198] sm:$0xff]
        %v588 = vld [vmem:[%s3 + $0x1a0] sm:$0xff]
        %v589 = vld [vmem:[%s3 + $0x1a8] sm:$0xff]
        %v590 = vld [vmem:[%s3 + $0x1b0] sm:$0xff]
        %v591 = vld [vmem:[%s3 + $0x1b8] sm:$0xff]
        %v592 = vld [vmem:[%s3 + $0x1c0] sm:$0xff]
        %v593 = vld [vmem:[%s3 + $0x1c8] sm:$0xff]
        %v594 = vld [vmem:[%s3 + $0x1d0] sm:$0xff]
        %v595 = vld [vmem:[%s3 + $0x1d8] sm:$0xff]
        %v596 = vld [vmem:[%s3 + $0x1e0] sm:$0xff]
        %v597 = vld [vmem:[%s3 + $0x1e8] sm:$0xff]
        %v598 = vld [vmem:[%s3 + $0x1f0] sm:$0xff]
        %v599 = vld [vmem:[%s3 + $0x1f8] sm:$0xff]
        %v600 = vld [vmem:[%s4] sm:$0x1]
        %v602 = vlaneseq
        %v603 = vshrl.u32 %v602, 7
        %v604 = vsub.s32 0, %v603
        %v605 = vrot.slane %v600, %v604
        %607 = vmatprep.subr.mxu0 0.0
        %608 = vmatpush1.msra.mxu0 %v551
        %609 = vmatprep.subr.mxu0 0.0
        %610 = vmatpush1.msra.mxu0 %v550
        %611 = vmatprep.subr.mxu0 0.0
        %612 = vmatpush1.msra.mxu0 %v549
        %613 = vmatprep.subr.mxu0 0.0
        %614 = vmatpush1.msra.mxu0 %v548
        %615 = vmatprep.subr.mxu0 0.0
        %616 = vmatpush1.msra.mxu0 %v547
        %617 = vmatprep.subr.mxu0 0.0
        %618 = vmatpush1.msra.mxu0 %v546
        %619 = vmatprep.subr.mxu0 0.0
        %620 = vmatpush1.msra.mxu0 %v545
        %621 = vmatprep.subr.mxu0 0.0
        %622 = vmatpush1.msra.mxu0 %v544
        %623 = vmatprep.subr.mxu0 0.0
        %624 = vmatpush1.msra.mxu0 %v543
        %625 = vmatprep.subr.mxu0 0.0
        %626 = vmatpush1.msra.mxu0 %v542
        %627 = vmatprep.subr.mxu0 0.0
        %628 = vmatpush1.msra.mxu0 %v541
        %629 = vmatprep.subr.mxu0 0.0
        %630 = vmatpush1.msra.mxu0 %v540
        %631 = vmatprep.subr.mxu0 0.0
        %632 = vmatpush1.msra.mxu0 %v539
        %633 = vmatprep.subr.mxu0 0.0
        %634 = vmatpush1.msra.mxu0 %v538
        %635 = vmatprep.subr.mxu0 0.0
        %636 = vmatpush1.msra.mxu0 %v537
        %637 = vmatprep.subr.mxu0 0.0
        %638 = vmatpush1.msra.mxu0 %v536
        %639 = vmatprep.subr.mxu0 0.0
        %640 = vmatpush2.msra.mxu0 %v567
        %641 = vmatprep.subr.mxu0 0.0
        %642 = vmatpush2.msra.mxu0 %v566
        %643 = vmatprep.subr.mxu0 0.0
        %644 = vmatpush2.msra.mxu0 %v565
        %645 = vmatprep.subr.mxu0 0.0
        %646 = vmatpush2.msra.mxu0 %v564
        %647 = vmatprep.subr.mxu0 0.0
        %648 = vmatpush2.msra.mxu0 %v563
        %649 = vmatprep.subr.mxu0 0.0
        %650 = vmatpush2.msra.mxu0 %v562
        %651 = vmatprep.subr.mxu0 0.0
        %652 = vmatpush2.msra.mxu0 %v561
        %653 = vmatprep.subr.mxu0 0.0
        %654 = vmatpush2.msra.mxu0 %v560
        %655 = vmatprep.subr.mxu0 0.0
        %656 = vmatpush2.msra.mxu0 %v559
        %657 = vmatprep.subr.mxu0 0.0
        %658 = vmatpush2.msra.mxu0 %v558
        %659 = vmatprep.subr.mxu0 0.0
        %660 = vmatpush2.msra.mxu0 %v557
        %661 = vmatprep.subr.mxu0 0.0
        %662 = vmatpush2.msra.mxu0 %v556
        %663 = vmatprep.subr.mxu0 0.0
        %664 = vmatpush2.msra.mxu0 %v555
        %665 = vmatprep.subr.mxu0 0.0
        %666 = vmatpush2.msra.mxu0 %v554
        %667 = vmatprep.subr.mxu0 0.0
        %668 = vmatpush2.msra.mxu0 %v553
        %669 = vmatprep.subr.mxu0 0.0
        %670 = vmatpush2.msra.mxu0 %v552
        %671 = vmatprep.mubr.f32.mxu0 %v533
        %672 = vmatmul.mubr.f32.gmra.mxu0 %v532
        %v673 = vpop.f32.mrf.mxu0
        %v674 = vadd.f32 %v605, %v673
        %v675 = vpop.f32.mrf.mxu0
        %676 = vdwg.mxu0
        %677 = vmatprep.subr.mxu0 0.0
        %678 = vmatpush1.msra.mxu0 %v583
        %679 = vmatprep.subr.mxu0 0.0
        %680 = vmatpush1.msra.mxu0 %v582
        %681 = vmatprep.subr.mxu0 0.0
        %682 = vmatpush1.msra.mxu0 %v581
        %683 = vmatprep.subr.mxu0 0.0
        %684 = vmatpush1.msra.mxu0 %v580
        %685 = vmatprep.subr.mxu0 0.0
        %686 = vmatpush1.msra.mxu0 %v579
        %687 = vmatprep.subr.mxu0 0.0
        %688 = vmatpush1.msra.mxu0 %v578
        %689 = vmatprep.subr.mxu0 0.0
        %690 = vmatpush1.msra.mxu0 %v577
        %691 = vmatprep.subr.mxu0 0.0
        %692 = vmatpush1.msra.mxu0 %v576
        %693 = vmatprep.subr.mxu0 0.0
        %694 = vmatpush1.msra.mxu0 %v575
        %695 = vmatprep.subr.mxu0 0.0
        %696 = vmatpush1.msra.mxu0 %v574
        %697 = vmatprep.subr.mxu0 0.0
        %698 = vmatpush1.msra.mxu0 %v573
        %699 = vmatprep.subr.mxu0 0.0
        %700 = vmatpush1.msra.mxu0 %v572
        %701 = vmatprep.subr.mxu0 0.0
        %702 = vmatpush1.msra.mxu0 %v571
        %703 = vmatprep.subr.mxu0 0.0
        %704 = vmatpush1.msra.mxu0 %v570
        %705 = vmatprep.subr.mxu0 0.0
        %706 = vmatpush1.msra.mxu0 %v569
        %707 = vmatprep.subr.mxu0 0.0
        %708 = vmatpush1.msra.mxu0 %v568
        %709 = vmatprep.subr.mxu0 0.0
        %710 = vmatpush2.msra.mxu0 %v599
        %711 = vmatprep.subr.mxu0 0.0
        %712 = vmatpush2.msra.mxu0 %v598
        %713 = vmatprep.subr.mxu0 0.0
        %714 = vmatpush2.msra.mxu0 %v597
        %715 = vmatprep.subr.mxu0 0.0
        %716 = vmatpush2.msra.mxu0 %v596
        %717 = vmatprep.subr.mxu0 0.0
        %718 = vmatpush2.msra.mxu0 %v595
        %719 = vmatprep.subr.mxu0 0.0
        %720 = vmatpush2.msra.mxu0 %v594
        %721 = vmatprep.subr.mxu0 0.0
        %722 = vmatpush2.msra.mxu0 %v593
        %723 = vmatprep.subr.mxu0 0.0
        %724 = vmatpush2.msra.mxu0 %v592
        %725 = vmatprep.subr.mxu0 0.0
        %726 = vmatpush2.msra.mxu0 %v591
        %727 = vmatprep.subr.mxu0 0.0
        %728 = vmatpush2.msra.mxu0 %v590
        %729 = vmatprep.subr.mxu0 0.0
        %730 = vmatpush2.msra.mxu0 %v589
        %731 = vmatprep.subr.mxu0 0.0
        %732 = vmatpush2.msra.mxu0 %v588
        %733 = vmatprep.subr.mxu0 0.0
        %734 = vmatpush2.msra.mxu0 %v587
        %735 = vmatprep.subr.mxu0 0.0
        %736 = vmatpush2.msra.mxu0 %v586
        %737 = vmatprep.subr.mxu0 0.0
        %738 = vmatpush2.msra.mxu0 %v585
        %739 = vmatprep.subr.mxu0 0.0
        %740 = vmatpush2.msra.mxu0 %v584
        %741 = vmatprep.mubr.f32.mxu0 %v535
        %742 = vmatmul.mubr.f32.gmra.mxu0 %v534
        %v743 = vpop.f32.mrf.mxu0
        %v744 = vadd.f32 %v674, %v743
        %v745 = vpop.f32.mrf.mxu0
        %746 = vdwg.mxu0
        %747 = vst [vmem:[%s237] sm:$0xff] %v744
        %p748 = scmp.lt.s32.totalorder %s17, 3
        %s749 = scalar_select %p748, %s17, 3
        %s750 = smul.addr %s749, 8
        %s751 = scalar_lea.vmem %s5, %s750
        // Predicated region
        $region45: #{centroid_nn_forward.1} parent=39 // pred_check
          %p752 = pneg %p145
        $region46: #{centroid_nn_forward.1} parent=39 // pred_check_branch
          %754 = sbr.rel (%p752) target = $region48
        $region47: #{centroid_nn_forward.1} parent=39 // pred_region
          _
        $region48: #{centroid_nn_forward.1} parent=39 // pred_fallthru
          _
      $region40: #{centroid_nn_forward.1} parent=5 // pred_fallthru
        _
      %p755 = scmp.le.s32.totalorder 2, %s12
      // Predicated region
      $region49: #{centroid_nn_forward.1} parent=5 // pred_check
        %p756 = pneg %p755
      $region50: #{centroid_nn_forward.1} parent=5 // pred_check_branch
        %758 = sbr.rel (%p756) target = $region52
      $region51: #{centroid_nn_forward.1} parent=5 // pred_region
        %s759 = ssub.s32 %s12, 2
        // Predicated region
        $region53: #{centroid_nn_forward.1} parent=51 // pred_check
          %p760 = pneg %p151
        $region54: #{centroid_nn_forward.1} parent=51 // pred_check_branch
          %762 = sbr.rel (%p760) target = $region56
        $region55: #{centroid_nn_forward.1} parent=51 // pred_region
          %p763 = scmp.lt.s32.totalorder %s18, 3
          %s764 = scalar_select %p763, %s18, 3
          %s765 = smul.addr %s764, 8
          %s766 = scalar_lea.vmem %s5, %s765
        $region56: #{centroid_nn_forward.1} parent=51 // pred_fallthru
          _
      $region52: #{centroid_nn_forward.1} parent=5 // pred_fallthru
        _
    $region6: #{centroid_nn_forward.1} parent=1 // loop_footer
      %s16 = sadd.s32 1, %s12
    $region7: #{centroid_nn_forward.1} parent=1 // loop_footer_branch
      %11 = sbr.rel target = $region3
    $region8: #{centroid_nn_forward.1} parent=1 // loop_exit
      _
    %767 = vsyncpa [#allocation3], 1
    %s768 = scalar_lea.sflag [#allocation3], 1
    %769 = vsyncpa %s768, 1

</llo_original>
